<compile_context>
chip_gen: v7x
topology: tpu7x:2x2x1
jax: 0.10.0
libtpu: 0.0.40
codegen_flags: <defaults>
</compile_context>

<pallas_src>
import functools

import numpy as np
import jax
import jax.numpy as jnp
from jax.experimental import pallas as pl
from jax.experimental.pallas import tpu as pltpu


def _round_up(x, m):
    return (x + m - 1) // m * m


def _fcoh_kernel(x_ref, y_ref, gm_ref, wn_ref, acc_c_ref, acc_n_ref, *,
                 tm, steps, m_rows, need_mask):
    s = pl.program_id(1)

    @pl.when(s == 0)
    def _():
        acc_c_ref[...] = jnp.zeros_like(acc_c_ref)
        acc_n_ref[...] = jnp.zeros_like(acc_n_ref)

    d = x_ref[...].astype(jnp.float32) - y_ref[...].astype(jnp.float32)

    if need_mask:
        # Mask rows that fall past the true (unpadded) row count M.  This also
        # zeroes fully-out-of-range blocks whose index_map was clamped.
        row0 = (pl.program_id(0) * steps + s) * tm
        rows = row0 + jax.lax.broadcasted_iota(jnp.int32, d.shape, 0)
        d = jnp.where(rows < m_rows, d, 0.0)

    # Group means of the difference (MSE of group means == mean of squared
    # group-mean differences since the mean is linear).
    # TODO(synk): pass precision=jax.lax.Precision.HIGHEST here if strict
    # bit-accuracy vs an f32 reference is required at very large M.
    dc = jnp.dot(d, gm_ref[...], preferred_element_type=jnp.float32)
    acc_c_ref[...] += dc * dc
    # Exact (f32, VPU-only) n-path: squared diff weighted by the multiplicity
    # of each feature in n_idx (handles repeated indices like index_select).
    acc_n_ref[...] += d * d * wn_ref[...]


@functools.partial(jax.jit, static_argnames=("c_idx_list", "n_idx", "c_wg", "n_wg"))
def fcoherence_loss(x, y, *, c_idx_list, n_idx, c_wg=1.0, n_wg=1.0):
    """c_idx_list: tuple of tuples of ints; n_idx: tuple of ints. dim=-1."""
    assert x.shape == y.shape
    F = x.shape[-1]
    G = len(c_idx_list)
    N = len(n_idx)
    if G == 0 or N == 0:
        raise ValueError("c_idx_list and n_idx must be non-empty")

    # ---- glue: flatten leading dims (free reshape, keep native dtype) ----
    xm = x.reshape(-1, F)
    ym = y.reshape(-1, F)
    M = xm.shape[0]

    # Group-averaging matrix, padded to a 128-lane multiple (zero columns
    # contribute nothing to the accumulated sums).
    Gp = _round_up(G, 128)
    gm_np = np.zeros((F, Gp), dtype=np.float32)
    for g, idxs in enumerate(c_idx_list):
        for f in idxs:  # counts handle repeated indices like index_select does
            gm_np[f, g] += 1.0
        gm_np[:, g] /= float(len(idxs))
    # Multiplicity weights for the n-path (exact elementwise MSE selection).
    wn_np = np.zeros((1, F), dtype=np.float32)
    for f in n_idx:
        wn_np[0, f] += 1.0
    gm = jnp.asarray(gm_np)
    wn = jnp.asarray(wn_np)

    # Row tile: as large as practical (memory-bound kernel); multiple of 8.
    tm = min(1024, _round_up(M, 8))
    nb = pl.cdiv(M, tm)                 # number of row blocks
    NC = 2                              # split across TensorCores (v7x); a
    steps = pl.cdiv(nb, NC)             # no-op loss on 1-core v5e/v6e chips
    need_mask = (NC * steps * tm) != M  # any block containing rows >= M?

    def xy_map(c, s):
        # Clamp so the DMA never walks past the last real block; clamped
        # (duplicate) blocks are fully masked to zero inside the kernel.
        return (jnp.minimum(c * steps + s, nb - 1), 0)

    kernel = functools.partial(
        _fcoh_kernel, tm=tm, steps=steps, m_rows=M, need_mask=need_mask)

    acc_c, acc_n = pl.pallas_call(
        kernel,
        out_shape=(
            jax.ShapeDtypeStruct((NC, tm, Gp), jnp.float32),
            jax.ShapeDtypeStruct((NC, tm, F), jnp.float32),
        ),
        grid_spec=pltpu.PrefetchScalarGridSpec(
            num_scalar_prefetch=0,
            grid=(NC, steps),
            in_specs=[
                pl.BlockSpec((tm, F), xy_map),
                pl.BlockSpec((tm, F), xy_map),
                pl.BlockSpec((F, Gp), lambda c, s: (0, 0)),
                pl.BlockSpec((1, F), lambda c, s: (0, 0)),
            ],
            out_specs=(
                pl.BlockSpec((None, tm, Gp), lambda c, s: (c, 0, 0)),
                pl.BlockSpec((None, tm, F), lambda c, s: (c, 0, 0)),
            ),
        ),
        compiler_params=pltpu.CompilerParams(
            dimension_semantics=("parallel", "arbitrary")),
    )(xm, ym, gm, wn)

    # Padded columns / masked rows contributed exactly 0, so use true counts.
    loss_c = jnp.sum(acc_c) / jnp.float32(M * G)
    loss_n = jnp.sum(acc_n) / jnp.float32(M * N)
    # TODO(synk): the c_wg/n_wg==None auto-weighting branch of the PyTorch
    # module (pure Python scalar math) is not implemented; fixed weights only.
    return jnp.float32(c_wg) * loss_c + jnp.float32(n_wg) * loss_n


def _reference_loss(x, y, c_idx_list, n_idx, c_wg, n_wg):
    in_mv = jnp.concatenate(
        [x[..., list(idx)].mean(-1, keepdims=True) for idx in c_idx_list], -1
    )
    ta_mv = jnp.concatenate(
        [y[..., list(idx)].mean(-1, keepdims=True) for idx in c_idx_list], -1
    )
    loss_c = jnp.mean((in_mv - ta_mv) ** 2)
    ni = list(n_idx)
    loss_n = jnp.mean((x[..., ni] - y[..., ni]) ** 2)
    return c_wg * loss_c + n_wg * loss_n


if __name__ == "__main__":
    key = jax.random.PRNGKey(0)
    k1, k2 = jax.random.split(key)

    B, T, F = 2, 8, 32  # input/target: [batch, seq, features], dim=-1
    x = jax.random.normal(k1, (B, T, F), dtype=jnp.float32)
    y = jax.random.normal(k2, (B, T, F), dtype=jnp.float32)

    c_idx_list = ((0, 1, 2, 3), (4, 5, 6, 7, 8), (10, 12, 14))
    n_idx = (16, 17, 18, 19, 20, 21, 22, 23)
    c_wg, n_wg = 1.0, 1.0

    loss = fcoherence_loss(
        x, y, c_idx_list=c_idx_list, n_idx=n_idx, c_wg=c_wg, n_wg=n_wg
    )
    loss = jax.block_until_ready(loss)

    ref = _reference_loss(x, y, c_idx_list, n_idx, c_wg, n_wg)
    assert np.allclose(np.asarray(loss), np.asarray(ref), rtol=1e-5, atol=1e-6), (
        loss, ref)

    print("KERNEL_OK")
</pallas_src>

<mosaic_0001>
module attributes {stable_mosaic.version = 11 : i64} {
  func.func @_fcoh_kernel(%arg0: i32, %arg1: i32, %arg2: memref<16x32xf32, #tpu.memory_space<vmem>>, %arg3: memref<16x32xf32, #tpu.memory_space<vmem>>, %arg4: memref<32x128xf32, #tpu.memory_space<vmem>>, %arg5: memref<1x32xf32, #tpu.memory_space<vmem>>, %arg6: memref<1x16x128xf32, #tpu.memory_space<vmem>>, %arg7: memref<1x16x32xf32, #tpu.memory_space<vmem>>) attributes {dimension_semantics = [#tpu.dimension_semantics<parallel>, #tpu.dimension_semantics<arbitrary>], iteration_bounds = array<i64: 2, 1>, scalar_prefetch = 0 : i64, scratch_operands = 0 : i64, tpu.core_type = #tpu.core_type<tc>, window_params = [{transform_indices = @transform_0, window_bounds = array<i64: 16, 32>}, {transform_indices = @transform_1, window_bounds = array<i64: 16, 32>}, {pipeline_mode = #tpu.pipeline_mode<synchronous>, transform_indices = @transform_2, window_bounds = array<i64: 32, 128>}, {pipeline_mode = #tpu.pipeline_mode<synchronous>, transform_indices = @transform_3, window_bounds = array<i64: 1, 32>}, {transform_indices = @transform_4, window_bounds = array<i64: 1, 16, 128>}, {transform_indices = @transform_5, window_bounds = array<i64: 1, 16, 32>}]} {
    %c0_i32 = arith.constant 0 : i32
    %0 = arith.cmpi eq, %arg1, %c0_i32 : i32
    %1 = arith.extui %0 : i1 to i32
    %c0_i32_0 = arith.constant 0 : i32
    %2 = arith.cmpi ne, %1, %c0_i32_0 : i32
    scf.if %2 {
      %cst_22 = arith.constant 0.000000e+00 : f32
      %35 = vector.broadcast %cst_22 : f32 to vector<16x128xf32>
      %c0_23 = arith.constant 0 : index
      %c0_24 = arith.constant 0 : index
      %c0_25 = arith.constant 0 : index
      %36 = vector.load %arg6[%c0_23, %c0_24, %c0_25] : memref<1x16x128xf32, #tpu.memory_space<vmem>>, vector<1x16x128xf32>
      %37 = vector.shape_cast %36 : vector<1x16x128xf32> to vector<16x128xf32>
      %38 = vector.shape_cast %35 : vector<16x128xf32> to vector<1x16x128xf32>
      tpu.vector_store %arg6[%c0_23, %c0_24, %c0_25], %38 {strides = array<i32>} : memref<1x16x128xf32, #tpu.memory_space<vmem>>, vector<1x16x128xf32>,
      %cst_26 = arith.constant 0.000000e+00 : f32
      %39 = vector.broadcast %cst_26 : f32 to vector<16x32xf32>
      %c0_27 = arith.constant 0 : index
      %c0_28 = arith.constant 0 : index
      %c0_29 = arith.constant 0 : index
      %40 = vector.load %arg7[%c0_27, %c0_28, %c0_29] : memref<1x16x32xf32, #tpu.memory_space<vmem>>, vector<1x16x32xf32>
      %41 = vector.shape_cast %40 : vector<1x16x32xf32> to vector<16x32xf32>
      %42 = vector.shape_cast %39 : vector<16x32xf32> to vector<1x16x32xf32>
      tpu.vector_store %arg7[%c0_27, %c0_28, %c0_29], %42 {strides = array<i32>} : memref<1x16x32xf32, #tpu.memory_space<vmem>>, vector<1x16x32xf32>,
    } else {
    }
    %c0 = arith.constant 0 : index
    %c0_1 = arith.constant 0 : index
    %3 = vector.load %arg2[%c0, %c0_1] : memref<16x32xf32, #tpu.memory_space<vmem>>, vector<16x32xf32>
    %c0_2 = arith.constant 0 : index
    %c0_3 = arith.constant 0 : index
    %4 = vector.load %arg3[%c0_2, %c0_3] : memref<16x32xf32, #tpu.memory_space<vmem>>, vector<16x32xf32>
    %5 = arith.subf %3, %4 : vector<16x32xf32>
    %c1_i32 = arith.constant 1 : i32
    %6 = arith.muli %arg0, %c1_i32 : i32
    %7 = arith.addi %6, %arg1 : i32
    %c16_i32 = arith.constant 16 : i32
    %8 = arith.muli %7, %c16_i32 : i32
    %9 = tpu.iota {dimensions = array<i32: 0>} : vector<16x32xi32>
    %10 = vector.broadcast %8 : i32 to vector<16x32xi32>
    %11 = arith.addi %10, %9 : vector<16x32xi32>
    %c16_i32_4 = arith.constant 16 : i32
    %12 = vector.broadcast %c16_i32_4 : i32 to vector<16x32xi32>
    %13 = arith.cmpi slt, %11, %12 : vector<16x32xi32>
    %cst = arith.constant 0.000000e+00 : f32
    %14 = vector.broadcast %cst : f32 to vector<16x32xf32>
    %15 = arith.select %13, %5, %14 : vector<16x32xi1>, vector<16x32xf32>
    %c0_5 = arith.constant 0 : index
    %c0_6 = arith.constant 0 : index
    %16 = vector.load %arg4[%c0_5, %c0_6] : memref<32x128xf32, #tpu.memory_space<vmem>>, vector<32x128xf32>
    %cst_7 = arith.constant dense<0.000000e+00> : vector<16x128xf32>
    %17 = tpu.matmul %15, %16, %cst_7 {dimension_numbers = #tpu.dot_dimension_numbers<[1], [0], [0], [1], [0, 0, 1, 1], [], []>} : vector<16x32xf32>, vector<32x128xf32>, vector<16x128xf32> -> vector<16x128xf32>
    %c0_8 = arith.constant 0 : index
    %c0_9 = arith.constant 0 : index
    %c0_10 = arith.constant 0 : index
    %18 = vector.load %arg6[%c0_8, %c0_9, %c0_10] : memref<1x16x128xf32, #tpu.memory_space<vmem>>, vector<1x16x128xf32>
    %19 = vector.shape_cast %18 : vector<1x16x128xf32> to vector<16x128xf32>
    %20 = arith.mulf %17, %17 : vector<16x128xf32>
    %21 = arith.addf %19, %20 : vector<16x128xf32>
    %c0_11 = arith.constant 0 : index
    %c0_12 = arith.constant 0 : index
    %c0_13 = arith.constant 0 : index
    %22 = vector.load %arg6[%c0_11, %c0_12, %c0_13] : memref<1x16x128xf32, #tpu.memory_space<vmem>>, vector<1x16x128xf32>
    %23 = vector.shape_cast %22 : vector<1x16x128xf32> to vector<16x128xf32>
    %24 = vector.shape_cast %21 : vector<16x128xf32> to vector<1x16x128xf32>
    tpu.vector_store %arg6[%c0_11, %c0_12, %c0_13], %24 {strides = array<i32>} : memref<1x16x128xf32, #tpu.memory_space<vmem>>, vector<1x16x128xf32>,
    %c0_14 = arith.constant 0 : index
    %c0_15 = arith.constant 0 : index
    %c0_16 = arith.constant 0 : index
    %25 = vector.load %arg7[%c0_14, %c0_15, %c0_16] : memref<1x16x32xf32, #tpu.memory_space<vmem>>, vector<1x16x32xf32>
    %26 = vector.shape_cast %25 : vector<1x16x32xf32> to vector<16x32xf32>
    %27 = arith.mulf %15, %15 : vector<16x32xf32>
    %c0_17 = arith.constant 0 : index
    %c0_18 = arith.constant 0 : index
    %28 = vector.load %arg5[%c0_17, %c0_18] : memref<1x32xf32, #tpu.memory_space<vmem>>, vector<1x32xf32>
    %29 = vector.broadcast %28 : vector<1x32xf32> to vector<16x32xf32>
    %30 = arith.mulf %27, %29 : vector<16x32xf32>
    %31 = arith.addf %26, %30 : vector<16x32xf32>
    %c0_19 = arith.constant 0 : index
    %c0_20 = arith.constant 0 : index
    %c0_21 = arith.constant 0 : index
    %32 = vector.load %arg7[%c0_19, %c0_20, %c0_21] : memref<1x16x32xf32, #tpu.memory_space<vmem>>, vector<1x16x32xf32>
    %33 = vector.shape_cast %32 : vector<1x16x32xf32> to vector<16x32xf32>
    %34 = vector.shape_cast %31 : vector<16x32xf32> to vector<1x16x32xf32>
    tpu.vector_store %arg7[%c0_19, %c0_20, %c0_21], %34 {strides = array<i32>} : memref<1x16x32xf32, #tpu.memory_space<vmem>>, vector<1x16x32xf32>,
    return
  }
  func.func @transform_0(%arg0: i32, %arg1: i32) -> (i32, i32) {
    %c1_i32 = arith.constant 1 : i32
    %0 = arith.muli %arg0, %c1_i32 : i32
    %1 = arith.addi %0, %arg1 : i32
    %c0_i32 = arith.constant 0 : i32
    %2 = arith.minsi %1, %c0_i32 : i32
    %c0_i32_0 = arith.constant 0 : i32
    %c0_i32_1 = arith.constant 0 : i32
    return %2, %c0_i32_0 : i32, i32
  }
  func.func @transform_1(%arg0: i32, %arg1: i32) -> (i32, i32) {
    %c1_i32 = arith.constant 1 : i32
    %0 = arith.muli %arg0, %c1_i32 : i32
    %1 = arith.addi %0, %arg1 : i32
    %c0_i32 = arith.constant 0 : i32
    %2 = arith.minsi %1, %c0_i32 : i32
    %c0_i32_0 = arith.constant 0 : i32
    %c0_i32_1 = arith.constant 0 : i32
    return %2, %c0_i32_0 : i32, i32
  }
  func.func @transform_2(%arg0: i32, %arg1: i32) -> (i32, i32) {
    %c0_i32 = arith.constant 0 : i32
    %c0_i32_0 = arith.constant 0 : i32
    %c0_i32_1 = arith.constant 0 : i32
    return %c0_i32, %c0_i32_0 : i32, i32
  }
  func.func @transform_3(%arg0: i32, %arg1: i32) -> (i32, i32) {
    %c0_i32 = arith.constant 0 : i32
    %c0_i32_0 = arith.constant 0 : i32
    %c0_i32_1 = arith.constant 0 : i32
    return %c0_i32, %c0_i32_0 : i32, i32
  }
  func.func @transform_4(%arg0: i32, %arg1: i32) -> (i32, i32, i32) {
    %c0_i32 = arith.constant 0 : i32
    %c0_i32_0 = arith.constant 0 : i32
    %c0_i32_1 = arith.constant 0 : i32
    return %arg0, %c0_i32, %c0_i32_0 : i32, i32, i32
  }
  func.func @transform_5(%arg0: i32, %arg1: i32) -> (i32, i32, i32) {
    %c0_i32 = arith.constant 0 : i32
    %c0_i32_0 = arith.constant 0 : i32
    %c0_i32_1 = arith.constant 0 : i32
    return %arg0, %c0_i32, %c0_i32_0 : i32, i32, i32
  }
}

</mosaic_0001>

<llo_original>
// kernel: fcoherence_loss.1
$region0: #{fcoherence_loss.1}
  #allocation0 [shape = 'u32[]', space=smem, size = 0x4, offset = 0x4, fixed_abs, tag = 'smem constant byte address 0x4 - core index']
  #allocation1 [shape = 'u32[144,128]{1,0:T(1,128)}', space=vmem, size = 0x12000, scoped, tag = 'internal scratch']
  %s0 = inlined_call_operand.hbm [shape: f32[16,32], index: 0, kind: input, shape index: {}]
  %s1 = inlined_call_operand.hbm [shape: f32[16,32], index: 1, kind: input, shape index: {}]
  %s2 = inlined_call_operand.hbm [shape: f32[32,128], index: 2, kind: input, shape index: {}]
  %s3 = inlined_call_operand.vmem [shape: f32[1,32], index: 3, kind: input, shape index: {}]
  %s4 = inlined_call_operand.vmem [shape: f32[2,16,128], index: 4, kind: output, shape index: {0}]
  %s5 = inlined_call_operand.vmem [shape: f32[2,16,32], index: 5, kind: output, shape index: {1}]
  %6 = xla_tuple %s4, %s5
  %s7 = sld [smem:[#allocation0]]
  $region73: #{fcoherence_loss.1} parent=0
    _
  %s9 = ssub.s32 1, %s7
  %s10 = scalar_select 0, %s9, %s7
  $region1: #{fcoherence_loss.1} parent=0
    #allocation2 [shape = 'u8[16384]{0}', space=vmem, size = 0x4000, scoped, tag = 'input window, operand 0']
    #allocation3 [shape = 's32[2]{0}', space=sflag, size = 0x8, scoped, tag = 'scoped memory for fcoherence_loss.1']
    #allocation4 [shape = 'u8[16384]{0}', space=vmem, size = 0x4000, scoped, tag = 'input window, operand 1']
    #allocation5 [shape = 's32[2]{0}', space=sflag, size = 0x8, scoped, tag = 'scoped memory for fcoherence_loss.1']
    #allocation6 [shape = 'u8[16384]{0}', space=vmem, size = 0x4000, scoped, tag = 'input window, operand 2, single buffered']
    %11 = vsyncpa [#allocation3], 0
    %s12 = scalar_lea.sflag [#allocation3], 1
    %13 = vsyncpa %s12, 0
    %14 = vsyncpa [#allocation5], 0
    %s15 = scalar_lea.sflag [#allocation5], 1
    %16 = vsyncpa %s15, 0
    loop: start=0, step=1, limit=4
    $region2: #{fcoherence_loss.1} parent=1 // loop_pre_header
      _
    $region3: #{fcoherence_loss.1} parent=1 // loop_header
      %s18 = sphi 0, %s22
      %p19 = scmp.ge.s32.totalorder %s18, 4
      %s25 = sphi 0, %s37
      %s26 = sphi 0, %s33
      %s27 = sphi 0, %s25
      %s28 = sphi 0, %s26
      %s29 = sphi 0, %s27
      %s30 = sphi 0, %s28
      %s46 = sphi 0, %s48
      %s49 = sphi 0, %s46
      %s50 = sphi 0, %s49
      %s66 = sphi 0, %s50
      %s78 = sphi 0, %s80
      %s81 = sphi 0, %s78
      %s82 = sphi 0, %s81
      %s98 = sphi 0, %s82
      %s102 = sphi 0, %s102
      %s104 = sphi 0, %s102
      %s105 = sphi 0, %s104
      %s119 = sphi 0, %s105
      %s123 = sphi 0, %s123
      %s125 = sphi 0, %s123
      %s126 = sphi 0, %s125
      %s140 = sphi 0, %s126
      %s146 = sphi 0, %s148
      %s149 = sphi 0, %s146
      %s150 = sphi 0, %s149
      %s166 = sphi 0, %s150
      %s172 = sphi 0, %s174
      %s175 = sphi 0, %s172
      %s176 = sphi 0, %s175
      %s192 = sphi 0, %s176
    $region4: #{fcoherence_loss.1} parent=1 // loop_header_branch
      %21 = sbr.rel (%p19) target = $region8
    $region5: #{fcoherence_loss.1} parent=1 // loop_body
      %s23 = ssub.s32 %s18, 1
      %s24 = ssub.s32 %s18, 2
      %s31 = sadd.s32 1, %s26
      %p32 = scmp.ge.s32.totalorder %s31, 1
      %s33 = scalar_select %p32, 0, %s31
      %s34 = sadd.s32 1, %s25
      %s35 = scalar_select %p32, %s34, %s25
      %p36 = scmp.ge.s32.totalorder %s35, 2
      %s37 = scalar_select %p36, 0, %s35
      %s38 = sadd.s32 %s25, %s26
      %p39 = scmp.lt.s32.totalorder %s38, 0
      %s40 = scalar_select %p39, %s38, 0
      %s41 = sadd.s32 %s37, %s33
      %p42 = scmp.lt.s32.totalorder %s41, 0
      %s43 = scalar_select %p42, %s41, 0
      %s44 = ssub.s32 %s40, %s43
      %p45 = scmp.eq.s32.totalorder %s44, 0
      %s47 = sadd.s32 %s46, 1
      %s48 = scalar_select %p45, %s46, %s47
      %p51 = pneg %p45
      %p52 = scmp.eq.s32.totalorder %s18, 1
      %p53 = por %p51, %p52
      %p54 = scmp.ne.s32.totalorder %s46, %s49
      %p55 = scmp.eq.s32.totalorder %s18, 0
      %p56 = por %p54, %p55
      %p57 = scmp.ne.s32.totalorder %s46, %s49
      %p58 = scmp.eq.s32.totalorder %s23, 1
      %p59 = por %p57, %p58
      %p60 = scmp.ne.s32.totalorder %s49, %s50
      %p61 = scmp.eq.s32.totalorder %s23, 0
      %p62 = por %p60, %p61
      %p63 = scmp.ne.s32.totalorder %s49, %s50
      %p64 = scmp.eq.s32.totalorder %s24, 1
      %p65 = por %p63, %p64
      %p67 = scmp.ne.s32.totalorder %s50, %s66
      %p68 = scmp.eq.s32.totalorder %s24, 0
      %p69 = por %p67, %p68
      %s70 = sadd.s32 %s25, %s26
      %p71 = scmp.lt.s32.totalorder %s70, 0
      %s72 = scalar_select %p71, %s70, 0
      %s73 = sadd.s32 %s37, %s33
      %p74 = scmp.lt.s32.totalorder %s73, 0
      %s75 = scalar_select %p74, %s73, 0
      %s76 = ssub.s32 %s72, %s75
      %p77 = scmp.eq.s32.totalorder %s76, 0
      %s79 = sadd.s32 %s78, 1
      %s80 = scalar_select %p77, %s78, %s79
      %p83 = pneg %p77
      %p84 = scmp.eq.s32.totalorder %s18, 1
      %p85 = por %p83, %p84
      %p86 = scmp.ne.s32.totalorder %s78, %s81
      %p87 = scmp.eq.s32.totalorder %s18, 0
      %p88 = por %p86, %p87
      %p89 = scmp.ne.s32.totalorder %s78, %s81
      %p90 = scmp.eq.s32.totalorder %s23, 1
      %p91 = por %p89, %p90
      %p92 = scmp.ne.s32.totalorder %s81, %s82
      %p93 = scmp.eq.s32.totalorder %s23, 0
      %p94 = por %p92, %p93
      %p95 = scmp.ne.s32.totalorder %s81, %s82
      %p96 = scmp.eq.s32.totalorder %s24, 1
      %p97 = por %p95, %p96
      %p99 = scmp.ne.s32.totalorder %s82, %s98
      %p100 = scmp.eq.s32.totalorder %s24, 0
      %p101 = por %p99, %p100
      %s103 = sadd.s32 %s102, 1
      %p106 = scmp.eq.s32.totalorder %s18, 1
      %p107 = scmp.ne.s32.totalorder %s102, %s104
      %p108 = scmp.eq.s32.totalorder %s18, 0
      %p109 = por %p107, %p108
      %p110 = scmp.ne.s32.totalorder %s102, %s104
      %p111 = scmp.eq.s32.totalorder %s23, 1
      %p112 = por %p110, %p111
      %p113 = scmp.ne.s32.totalorder %s104, %s105
      %p114 = scmp.eq.s32.totalorder %s23, 0
      %p115 = por %p113, %p114
      %p116 = scmp.ne.s32.totalorder %s104, %s105
      %p117 = scmp.eq.s32.totalorder %s24, 1
      %p118 = por %p116, %p117
      %p120 = scmp.ne.s32.totalorder %s105, %s119
      %p121 = scmp.eq.s32.totalorder %s24, 0
      %p122 = por %p120, %p121
      %s124 = sadd.s32 %s123, 1
      %p127 = scmp.eq.s32.totalorder %s18, 1
      %p128 = scmp.ne.s32.totalorder %s123, %s125
      %p129 = scmp.eq.s32.totalorder %s18, 0
      %p130 = por %p128, %p129
      %p131 = scmp.ne.s32.totalorder %s123, %s125
      %p132 = scmp.eq.s32.totalorder %s23, 1
      %p133 = por %p131, %p132
      %p134 = scmp.ne.s32.totalorder %s125, %s126
      %p135 = scmp.eq.s32.totalorder %s23, 0
      %p136 = por %p134, %p135
      %p137 = scmp.ne.s32.totalorder %s125, %s126
      %p138 = scmp.eq.s32.totalorder %s24, 1
      %p139 = por %p137, %p138
      %p141 = scmp.ne.s32.totalorder %s126, %s140
      %p142 = scmp.eq.s32.totalorder %s24, 0
      %p143 = por %p141, %p142
      %s144 = ssub.s32 %s25, %s37
      %p145 = scmp.eq.s32.totalorder %s144, 0
      %s147 = sadd.s32 %s146, 1
      %s148 = scalar_select %p145, %s146, %s147
      %p151 = pneg %p145
      %p152 = scmp.eq.s32.totalorder %s18, 1
      %p153 = por %p151, %p152
      %p154 = scmp.ne.s32.totalorder %s146, %s149
      %p155 = scmp.eq.s32.totalorder %s18, 0
      %p156 = por %p154, %p155
      %p157 = scmp.ne.s32.totalorder %s146, %s149
      %p158 = scmp.eq.s32.totalorder %s23, 1
      %p159 = por %p157, %p158
      %p160 = scmp.ne.s32.totalorder %s149, %s150
      %p161 = scmp.eq.s32.totalorder %s23, 0
      %p162 = por %p160, %p161
      %p163 = scmp.ne.s32.totalorder %s149, %s150
      %p164 = scmp.eq.s32.totalorder %s24, 1
      %p165 = por %p163, %p164
      %p167 = scmp.ne.s32.totalorder %s150, %s166
      %p168 = scmp.eq.s32.totalorder %s24, 0
      %p169 = por %p167, %p168
      %s170 = ssub.s32 %s25, %s37
      %p171 = scmp.eq.s32.totalorder %s170, 0
      %s173 = sadd.s32 %s172, 1
      %s174 = scalar_select %p171, %s172, %s173
      %p177 = pneg %p171
      %p178 = scmp.eq.s32.totalorder %s18, 1
      %p179 = por %p177, %p178
      %p180 = scmp.ne.s32.totalorder %s172, %s175
      %p181 = scmp.eq.s32.totalorder %s18, 0
      %p182 = por %p180, %p181
      %p183 = scmp.ne.s32.totalorder %s172, %s175
      %p184 = scmp.eq.s32.totalorder %s23, 1
      %p185 = por %p183, %p184
      %p186 = scmp.ne.s32.totalorder %s175, %s176
      %p187 = scmp.eq.s32.totalorder %s23, 0
      %p188 = por %p186, %p187
      %p189 = scmp.ne.s32.totalorder %s175, %s176
      %p190 = scmp.eq.s32.totalorder %s24, 1
      %p191 = por %p189, %p190
      %p193 = scmp.ne.s32.totalorder %s176, %s192
      %p194 = scmp.eq.s32.totalorder %s24, 0
      %p195 = por %p193, %p194
      %p196 = scmp.le.s32.totalorder 1, %s18
      %p197 = scmp.lt.s32.totalorder %s18, 3
      %p198 = pnand %p196, %p197
      %p199 = pneg %p198
      // Predicated region
      $region9: #{fcoherence_loss.1} parent=5 // pred_check
        _
      $region10: #{fcoherence_loss.1} parent=5 // pred_check_branch
        %201 = sbr.rel (%p198) target = $region12
      $region11: #{fcoherence_loss.1} parent=5 // pred_region
        %s202 = ssub.s32 %s18, 1
        // Predicated region
        $region13: #{fcoherence_loss.1} parent=11 // pred_check
          %p203 = pneg %p115
        $region14: #{fcoherence_loss.1} parent=11 // pred_check_branch
          %205 = sbr.rel (%p203) target = $region16
        $region15: #{fcoherence_loss.1} parent=11 // pred_region
          %s207 = ssub.s32 512, 512
          %208 = vsyncadd [#allocation5], %s207
          %s209 = sshll.u32 [#allocation6], 4
          %s210 = int_to_ptr.vmem [resolvable:$true] %s209
          %215 = dma.hbm_to_vmem [thread:$0]  %s2, 512, %s210, [#allocation5], 128, 128, 8
        $region16: #{fcoherence_loss.1} parent=11 // pred_fallthru
          _
        // Predicated region
        $region17: #{fcoherence_loss.1} parent=11 // pred_check
          %p216 = pneg %p136
        $region18: #{fcoherence_loss.1} parent=11 // pred_check_branch
          %218 = sbr.rel (%p216) target = $region20
        $region19: #{fcoherence_loss.1} parent=11 // pred_region
          _
        $region20: #{fcoherence_loss.1} parent=11 // pred_fallthru
          _
      $region12: #{fcoherence_loss.1} parent=5 // pred_fallthru
        _
      %p219 = scmp.lt.s32.totalorder %s18, 2
      // Predicated region
      $region21: #{fcoherence_loss.1} parent=5 // pred_check
        %p220 = pneg %p219
      $region22: #{fcoherence_loss.1} parent=5 // pred_check_branch
        %222 = sbr.rel (%p220) target = $region24
      $region23: #{fcoherence_loss.1} parent=5 // pred_region
        // Predicated region
        $region25: #{fcoherence_loss.1} parent=23 // pred_check
          %p223 = pneg %p56
        $region26: #{fcoherence_loss.1} parent=23 // pred_check_branch
          %225 = sbr.rel (%p223) target = $region28
        $region27: #{fcoherence_loss.1} parent=23 // pred_region
          %s226 = sand.u32 %s46, 1
          %s227 = scalar_lea.sflag [#allocation3], %s226
          %s228 = sand.u32 %s46, 1
          %s229 = smul.addr %s228, 16
          %s230 = scalar_lea.vmem [#allocation2], %s229
          %s231 = sadd.s32 %s25, %s26
          %p232 = scmp.lt.s32.totalorder %s231, 0
          %s233 = scalar_select %p232, %s231, 0
          %s234 = smul.u32 2, %s233
          %s236 = ssub.s32 256, 256
          %237 = vsyncadd %s227, %s236
          %s238 = smul.addr %s234, 128
          %s239 = scalar_lea.hbm %s0, %s238
          %s240 = sshll.u32 %s230, 4
          %s241 = int_to_ptr.vmem [resolvable:$true] %s240
          %246 = dma.hbm_to_vmem [thread:$0]  %s239, 256, %s241, %s227, 128, 128, 8
        $region28: #{fcoherence_loss.1} parent=23 // pred_fallthru
          _
        // Predicated region
        $region29: #{fcoherence_loss.1} parent=23 // pred_check
          %p247 = pneg %p88
        $region30: #{fcoherence_loss.1} parent=23 // pred_check_branch
          %249 = sbr.rel (%p247) target = $region32
        $region31: #{fcoherence_loss.1} parent=23 // pred_region
          %s250 = sand.u32 %s18, 1
          %s251 = scalar_lea.sflag [#allocation5], %s250
          %s252 = sand.u32 %s78, 1
          %s253 = smul.addr %s252, 16
          %s254 = scalar_lea.vmem [#allocation4], %s253
          %s255 = sadd.s32 %s25, %s26
          %p256 = scmp.lt.s32.totalorder %s255, 0
          %s257 = scalar_select %p256, %s255, 0
          %s258 = smul.u32 2, %s257
          %s260 = ssub.s32 256, 256
          %261 = vsyncadd %s251, %s260
          %s262 = smul.addr %s258, 128
          %s263 = scalar_lea.hbm %s1, %s262
          %s264 = sshll.u32 %s254, 4
          %s265 = int_to_ptr.vmem [resolvable:$true] %s264
          %270 = dma.hbm_to_vmem [thread:$0]  %s263, 256, %s265, %s251, 128, 128, 8
        $region32: #{fcoherence_loss.1} parent=23 // pred_fallthru
          _
      $region24: #{fcoherence_loss.1} parent=5 // pred_fallthru
        _
      %p271 = scmp.le.s32.totalorder 1, %s18
      %p272 = scmp.lt.s32.totalorder %s18, 3
      %p273 = pnand %p271, %p272
      %p274 = pneg %p273
      // Predicated region
      $region33: #{fcoherence_loss.1} parent=5 // pred_check
        _
      $region34: #{fcoherence_loss.1} parent=5 // pred_check_branch
        %276 = sbr.rel (%p273) target = $region36
      $region35: #{fcoherence_loss.1} parent=5 // pred_region
        %s277 = ssub.s32 %s18, 1
        %s278 = sand.u32 %s49, 1
        %s279 = scalar_lea.sflag [#allocation3], %s278
        %s280 = sand.u32 %s49, 1
        %s281 = smul.addr %s280, 16
        %s282 = scalar_lea.vmem [#allocation2], %s281
        // Predicated region
        $region37: #{fcoherence_loss.1} parent=35 // pred_check
          %p283 = pneg %p62
        $region38: #{fcoherence_loss.1} parent=35 // pred_check_branch
          %285 = sbr.rel (%p283) target = $region40
        $region39: #{fcoherence_loss.1} parent=35 // pred_region
          %286 = dma.done %s279, 256
        $region40: #{fcoherence_loss.1} parent=35 // pred_fallthru
          _
        %s287 = sand.u32 %s23, 1
        %s288 = scalar_lea.sflag [#allocation5], %s287
        %s289 = sand.u32 %s81, 1
        %s290 = smul.addr %s289, 16
        %s291 = scalar_lea.vmem [#allocation4], %s290
        // Predicated region
        $region41: #{fcoherence_loss.1} parent=35 // pred_check
          %p292 = pneg %p94
        $region42: #{fcoherence_loss.1} parent=35 // pred_check_branch
          %294 = sbr.rel (%p292) target = $region44
        $region43: #{fcoherence_loss.1} parent=35 // pred_region
          %295 = dma.done %s288, 256
        $region44: #{fcoherence_loss.1} parent=35 // pred_fallthru
          _
        // Predicated region
        $region45: #{fcoherence_loss.1} parent=35 // pred_check
          %p296 = pneg %p115
        $region46: #{fcoherence_loss.1} parent=35 // pred_check_branch
          %298 = sbr.rel (%p296) target = $region48
        $region47: #{fcoherence_loss.1} parent=35 // pred_region
          %299 = dma.done [#allocation5], 512
        $region48: #{fcoherence_loss.1} parent=35 // pred_fallthru
          _
        %s300 = sand.u32 %s49, 1
        %s301 = scalar_lea.sflag [#allocation3], %s300
        %s302 = sand.u32 %s49, 1
        %s303 = smul.addr %s302, 16
        %s304 = scalar_lea.vmem [#allocation2], %s303
        %p305 = pneg %p62
        %p306 = pneg %p59
        %s307 = sand.u32 %s23, 1
        %s308 = scalar_lea.sflag [#allocation5], %s307
        %s309 = sand.u32 %s81, 1
        %s310 = smul.addr %s309, 16
        %s311 = scalar_lea.vmem [#allocation4], %s310
        %p312 = pneg %p94
        %p313 = pneg %p91
        %p314 = pneg %p115
        %p315 = pneg %p112
        %p316 = pneg %p136
        %p317 = pneg %p133
        %p318 = pneg %p162
        %p319 = pneg %p159
        %p320 = scmp.lt.s32.totalorder %s27, 1
        %s321 = scalar_select %p320, %s27, 1
        %s322 = smul.addr %s321, 2
        %s323 = smul.addr %s322, 8
        %s324 = scalar_lea.vmem %s4, %s323
        %p325 = pneg %p188
        %p326 = pneg %p185
        %p327 = scmp.lt.s32.totalorder %s27, 1
        %s328 = scalar_select %p327, %s27, 1
        %s329 = smul.addr %s328, 2
        %s330 = smul.addr %s329, 8
        %s331 = scalar_lea.vmem %s5, %s330
        %s332 = sadd.s32 %s27, %s28
        %p333 = scmp.lt.s32.totalorder %s332, 0
        %s334 = scalar_select %p333, %s332, 0
        %s335 = smul.u32 2, %s334
        %s336 = sadd.s32 %s27, %s28
        %p337 = scmp.lt.s32.totalorder %s336, 0
        %s338 = scalar_select %p337, %s336, 0
        %s339 = smul.u32 2, %s338
        %p340 = scmp.lt.s32.totalorder %s27, 1
        %s341 = scalar_select %p340, %s27, 1
        %s342 = smul.addr %s341, 2
        %s343 = smul.addr %s342, 8
        %s344 = scalar_lea.vmem %s4, %s343
        %p345 = scmp.lt.s32.totalorder %s27, 1
        %s346 = scalar_select %p345, %s27, 1
        %s347 = smul.addr %s346, 2
        %s348 = smul.addr %s347, 8
        %s349 = scalar_lea.vmem %s5, %s348
        %p350 = scmp.eq.s32.totalorder %s28, 0
        // Predicated region
        $region49: #{fcoherence_loss.1} parent=35 // pred_check
          %p351 = pneg %p350
        $region50: #{fcoherence_loss.1} parent=35 // pred_check_branch
          %353 = sbr.rel (%p351) target = $region52
        $region51: #{fcoherence_loss.1} parent=35 // pred_region
          %354 = vst [vmem:[%s344] sm:$0xff] 0.0
          %355 = vst [vmem:[%s344 + $0x8] sm:$0xff] 0.0
          %vm356 = vcmask 261120
          %357 = vst.msk [vmem:[%s349] sm:$0xff] %vm356, 0.0
          %358 = vst.msk [vmem:[%s349 + $0x8] sm:$0xff] %vm356, 0.0
        $region52: #{fcoherence_loss.1} parent=35 // pred_fallthru
          _
        %v359 = vld [vmem:[%s282] sm:$0xff]
        %v360 = vld [vmem:[%s282 + $0x8] sm:$0xff]
        %v361 = vld [vmem:[%s291] sm:$0xff]
        %v362 = vld [vmem:[%s291 + $0x8] sm:$0xff]
        %v363 = vsub.f32 %v359, %v361
        %v364 = vsub.f32 %v360, %v362
        %s365 = sadd.s32 %s27, %s28
        %s366 = smul.u32 %s365, 16
        %v367 = vlaneseq
        %v368 = vshrl.u32 %v367, 7
        %v369 = vadd.s32 %v368, 8
        %v370 = vstv %s366
        %v371 = vadd.s32 %v370, %v368
        %v372 = vadd.s32 %v370, %v369
        %vm373 = vcmp.lt.s32.totalorder %v371, 16
        %vm374 = vcmp.lt.s32.totalorder %v372, 16
        %v375 = vsel %vm373, %v363, 0.0
        %v376 = vsel %vm374, %v364, 0.0
        %v377 = vld [vmem:[#allocation6] sm:$0xff]
        %v378 = vld [vmem:[#allocation6 + $0x8] sm:$0xff]
        %v379 = vld [vmem:[#allocation6 + $0x10] sm:$0xff]
        %v380 = vld [vmem:[#allocation6 + $0x18] sm:$0xff]
        %vm381 = vcmask 261120
        %v383 = vsel %vm381, %v375, 0
        %v386 = vsel %vm381, %v376, 0
        %388 = vmatprep.subr.mxu0 0.0
        %389 = vmatpush1.msra.mxu0 %v377
        %390 = vmatprep.subr.mxu0 0.0
        %391 = vmatpush1.msra.mxu0 %v378
        %392 = vmatprep.subr.mxu0 0.0
        %393 = vmatpush1.msra.mxu0 %v379
        %394 = vmatprep.subr.mxu0 0.0
        %395 = vmatpush1.msra.mxu0 %v380
        %396 = vmatprep.subr.mxu0 0.0
        %397 = vmatpush1.msra.mxu0 0.0
        %398 = vmatprep.subr.mxu0 0.0
        %399 = vmatpush1.msra.mxu0 0.0
        %400 = vmatprep.subr.mxu0 0.0
        %401 = vmatpush1.msra.mxu0 0.0
        %402 = vmatprep.subr.mxu0 0.0
        %403 = vmatpush1.msra.mxu0 0.0
        %404 = vmatprep.subr.mxu0 0.0
        %405 = vmatpush1.msra.mxu0 0.0
        %406 = vmatprep.subr.mxu0 0.0
        %407 = vmatpush1.msra.mxu0 0.0
        %408 = vmatprep.subr.mxu0 0.0
        %409 = vmatpush1.msra.mxu0 0.0
        %410 = vmatprep.subr.mxu0 0.0
        %411 = vmatpush1.msra.mxu0 0.0
        %412 = vmatprep.subr.mxu0 0.0
        %413 = vmatpush1.msra.mxu0 0.0
        %414 = vmatprep.subr.mxu0 0.0
        %415 = vmatpush1.msra.mxu0 0.0
        %416 = vmatprep.subr.mxu0 0.0
        %417 = vmatpush1.msra.mxu0 0.0
        %418 = vmatprep.subr.mxu0 0.0
        %419 = vmatpush1.msra.mxu0 0.0
        %420 = vmatprep.subr.mxu0 0.0
        %421 = vmatpush1.msra.mxu0 0.0
        %422 = vmatprep.subr.mxu0 0.0
        %423 = vmatpush1.msra.mxu0 0.0
        %424 = vmatprep.subr.mxu0 0.0
        %425 = vmatpush1.msra.mxu0 0.0
        %426 = vmatprep.subr.mxu0 0.0
        %427 = vmatpush1.msra.mxu0 0.0
        %428 = vmatprep.subr.mxu0 0.0
        %429 = vmatpush1.msra.mxu0 0.0
        %430 = vmatprep.subr.mxu0 0.0
        %431 = vmatpush1.msra.mxu0 0.0
        %432 = vmatprep.subr.mxu0 0.0
        %433 = vmatpush1.msra.mxu0 0.0
        %434 = vmatprep.subr.mxu0 0.0
        %435 = vmatpush1.msra.mxu0 0.0
        %436 = vmatprep.subr.mxu0 0.0
        %437 = vmatpush1.msra.mxu0 0.0
        %438 = vmatprep.subr.mxu0 0.0
        %439 = vmatpush1.msra.mxu0 0.0
        %440 = vmatprep.subr.mxu0 0.0
        %441 = vmatpush1.msra.mxu0 0.0
        %442 = vmatprep.subr.mxu0 0.0
        %443 = vmatpush1.msra.mxu0 0.0
        %444 = vmatprep.subr.mxu0 0.0
        %445 = vmatpush1.msra.mxu0 0.0
        %446 = vmatprep.subr.mxu0 0.0
        %447 = vmatpush1.msra.mxu0 0.0
        %448 = vmatprep.subr.mxu0 0.0
        %449 = vmatpush1.msra.mxu0 0.0
        %450 = vmatprep.subr.mxu0 0.0
        %451 = vmatpush1.msra.mxu0 0.0
        %452 = vmatprep.mubr.f32.mxu0 0.0
        %453 = vmatmul.mubr.f32.gmra.mrb[0].mxu0 %v383
        %v454 = vpop.f32.mrb[0].mxu0
        %v455 = vadd.f32 0.0, %v454
        %v456 = vpop.f32.mrb[0].mxu0
        %457 = vmatprep.mubr.f32.mxu0 0.0
        %458 = vmatmul.mubr.f32.gmra.mrb[0].mxu0 %v386
        %v459 = vpop.f32.mrb[0].mxu0
        %v460 = vadd.f32 0.0, %v459
        %v461 = vpop.f32.mrb[0].mxu0
        %462 = vdwg.mxu0
        %v463 = vld [vmem:[%s344] sm:$0xff]
        %v464 = vld [vmem:[%s344 + $0x8] sm:$0xff]
        %v465 = vmul.f32 %v455, %v455
        %v466 = vmul.f32 %v460, %v460
        %v467 = vadd.f32 %v463, %v465
        %v468 = vadd.f32 %v464, %v466
        %469 = vst [vmem:[%s344] sm:$0xff] %v467
        %470 = vst [vmem:[%s344 + $0x8] sm:$0xff] %v468
        %v471 = vld [vmem:[%s349] sm:$0xff]
        %v472 = vld [vmem:[%s349 + $0x8] sm:$0xff]
        %v473 = vmul.f32 %v375, %v375
        %v474 = vmul.f32 %v376, %v376
        %v475 = vld [vmem:[%s3] sm:$0x1]
        %v477 = vlaneseq
        %v478 = vshrl.u32 %v477, 7
        %v479 = vsub.s32 0, %v478
        %v480 = vrot.slane %v475, %v479
        %v482 = vmul.f32 %v473, %v480
        %v483 = vmul.f32 %v474, %v480
        %v484 = vadd.f32 %v471, %v482
        %v485 = vadd.f32 %v472, %v483
        %486 = vst.msk [vmem:[%s349] sm:$0xff] %vm381, %v484
        %487 = vst.msk [vmem:[%s349 + $0x8] sm:$0xff] %vm381, %v485
        %p488 = scmp.lt.s32.totalorder %s27, 1
        %s489 = scalar_select %p488, %s27, 1
        %s490 = smul.addr %s489, 2
        %s491 = smul.addr %s490, 8
        %s492 = scalar_lea.vmem %s4, %s491
        %p493 = scmp.lt.s32.totalorder %s27, 1
        %s494 = scalar_select %p493, %s27, 1
        %s495 = smul.addr %s494, 2
        %s496 = smul.addr %s495, 8
        %s497 = scalar_lea.vmem %s5, %s496
        // Predicated region
        $region53: #{fcoherence_loss.1} parent=35 // pred_check
          %p498 = pneg %p159
        $region54: #{fcoherence_loss.1} parent=35 // pred_check_branch
          %500 = sbr.rel (%p498) target = $region56
        $region55: #{fcoherence_loss.1} parent=35 // pred_region
          _
        $region56: #{fcoherence_loss.1} parent=35 // pred_fallthru
          _
        // Predicated region
        $region57: #{fcoherence_loss.1} parent=35 // pred_check
          %p501 = pneg %p185
        $region58: #{fcoherence_loss.1} parent=35 // pred_check_branch
          %503 = sbr.rel (%p501) target = $region60
        $region59: #{fcoherence_loss.1} parent=35 // pred_region
          _
        $region60: #{fcoherence_loss.1} parent=35 // pred_fallthru
          _
      $region36: #{fcoherence_loss.1} parent=5 // pred_fallthru
        _
      %p504 = scmp.le.s32.totalorder 2, %s18
      // Predicated region
      $region61: #{fcoherence_loss.1} parent=5 // pred_check
        %p505 = pneg %p504
      $region62: #{fcoherence_loss.1} parent=5 // pred_check_branch
        %507 = sbr.rel (%p505) target = $region64
      $region63: #{fcoherence_loss.1} parent=5 // pred_region
        %s508 = ssub.s32 %s18, 2
        // Predicated region
        $region65: #{fcoherence_loss.1} parent=63 // pred_check
          %p509 = pneg %p165
        $region66: #{fcoherence_loss.1} parent=63 // pred_check_branch
          %511 = sbr.rel (%p509) target = $region68
        $region67: #{fcoherence_loss.1} parent=63 // pred_region
          %p512 = scmp.lt.s32.totalorder %s29, 1
          %s513 = scalar_select %p512, %s29, 1
          %s514 = smul.addr %s513, 2
          %s515 = smul.addr %s514, 8
          %s516 = scalar_lea.vmem %s4, %s515
        $region68: #{fcoherence_loss.1} parent=63 // pred_fallthru
          _
        // Predicated region
        $region69: #{fcoherence_loss.1} parent=63 // pred_check
          %p517 = pneg %p191
        $region70: #{fcoherence_loss.1} parent=63 // pred_check_branch
          %519 = sbr.rel (%p517) target = $region72
        $region71: #{fcoherence_loss.1} parent=63 // pred_region
          %p520 = scmp.lt.s32.totalorder %s29, 1
          %s521 = scalar_select %p520, %s29, 1
          %s522 = smul.addr %s521, 2
          %s523 = smul.addr %s522, 8
          %s524 = scalar_lea.vmem %s5, %s523
        $region72: #{fcoherence_loss.1} parent=63 // pred_fallthru
          _
      $region64: #{fcoherence_loss.1} parent=5 // pred_fallthru
        _
    $region6: #{fcoherence_loss.1} parent=1 // loop_footer
      %s22 = sadd.s32 1, %s18
    $region7: #{fcoherence_loss.1} parent=1 // loop_footer_branch
      %17 = sbr.rel target = $region3
    $region8: #{fcoherence_loss.1} parent=1 // loop_exit
      _
    %525 = vsyncpa [#allocation3], 1
    %s526 = scalar_lea.sflag [#allocation3], 1
    %527 = vsyncpa %s526, 1
    %528 = vsyncpa [#allocation5], 1
    %s529 = scalar_lea.sflag [#allocation5], 1
    %530 = vsyncpa %s529, 1

</llo_original>
